<compile_context>
chip_gen: v5e
topology: v5e:2x2
jax: 0.10.0
libtpu: 0.0.40
codegen_flags: <defaults>
</compile_context>

<pallas_src>
import jax
import jax.numpy as jnp
from jax.experimental import pallas as pl
from jax.experimental.pallas import tpu as pltpu


def _round_up(n: int, m: int) -> int:
    return ((n + m - 1) // m) * m


def _pick_tile_rows(batch: int, max_tile_rows: int) -> int:
    """Batch tile: multiple of 8, >=2 grid blocks when possible (v7x megacore),
    capped by max_tile_rows.  For tiny batches the block equals the full batch
    dim (always legal)."""
    if batch <= 8:
        return batch
    tm = _round_up(pl.cdiv(batch, 2), 8)
    return min(max_tile_rows, tm)


def _linear_kernel(x_ref, w_ref, b_ref, o_ref):
    # One (TM, F) x-tile per grid step: MXU matmul with f32 accumulation,
    # f32 bias add on the VPU, single cast at the store.
    acc = jnp.dot(x_ref[...], w_ref[...], preferred_element_type=jnp.float32)
    o_ref[...] = (acc + b_ref[...]).astype(o_ref.dtype)


def prepare_linear_params(weight, bias, *, compute_dtype=None):
    """One-time parameter prep (hoisted out of the per-call forward).

    weight : (num_classes, in_features)  -- as stored by nn.Linear
    bias   : (num_classes,)
    compute_dtype : optional streaming dtype for the weight (e.g. bf16);
                    halves W (and x) HBM bytes on every TPU generation,
                    v5e included.  Accumulation stays f32 in the kernel.
    Returns (weight_t, bias_row): (F, C) weight and (1, C) f32 bias.
    """
    w_dtype = jnp.float32 if compute_dtype is None else compute_dtype
    weight_t = jnp.asarray(weight).astype(w_dtype).T          # (F, C)
    bias_row = jnp.asarray(bias).astype(jnp.float32).reshape(1, -1)  # (1, C)
    return weight_t, bias_row


def linear_regression_forward(x, weight_t, bias_row, *,
                              output_dtype=jnp.float32, max_tile_rows=1024):
    """y = x.reshape(B, -1) @ weight_t + bias_row

    x         : (B, ...) -- flattened to (B, in_features), cast (once, if
                 needed) to weight_t.dtype, which is the streaming dtype.
    weight_t  : (in_features, num_classes) from prepare_linear_params
    bias_row  : (1, num_classes) float32    from prepare_linear_params
    returns   : (B, num_classes) output_dtype
    """
    B = x.shape[0]
    F, C = weight_t.shape
    stream_dtype = weight_t.dtype

    # Single reshape + at most one cast -> no extra HBM round trips of x.
    x2 = x.reshape(B, -1)
    if x2.dtype != stream_dtype:
        x2 = x2.astype(stream_dtype)

    TM = _pick_tile_rows(B, max_tile_rows)
    grid = (pl.cdiv(B, TM),)

    out = pl.pallas_call(
        _linear_kernel,
        out_shape=jax.ShapeDtypeStruct((B, C), output_dtype),
        grid=grid,
        in_specs=[
            # streamed x tiles -> double-buffered by Pallas, DMA overlaps MXU
            pl.BlockSpec((TM, F), lambda i: (i, 0)),
            # weight / bias: VMEM-resident (constant index_map)
            pl.BlockSpec((F, C), lambda i: (0, 0)),
            pl.BlockSpec((1, C), lambda i: (0, 0)),
        ],
        # Unpadded output: C equals the full array dim (legal block shape);
        # masked stores, but 16x less HBM writeback than lane-padding C=8->128.
        out_specs=pl.BlockSpec((TM, C), lambda i: (i, 0)),
        compiler_params=pltpu.CompilerParams(
            # parallel batch axis: shards across v7x's 2 TCs, neutral elsewhere
            dimension_semantics=("parallel",),
            # safe on v7x's 64 MiB VMEM; raise on v5e/v6e (128 MiB) for huge F
            vmem_limit_bytes=32 * 1024 * 1024,
        ),
        cost_estimate=pl.CostEstimate(
            flops=2 * B * F * C,
            bytes_accessed=(B * F * jnp.dtype(stream_dtype).itemsize
                            + F * C * jnp.dtype(stream_dtype).itemsize
                            + B * C * jnp.dtype(output_dtype).itemsize),
            transcendentals=0,
        ),
    )(x2, weight_t, bias_row)

    return out


if __name__ == "__main__":
    # Small shapes consistent with the module's forward.
    batch = 2
    in_features = 32
    num_classes = 8

    key = jax.random.PRNGKey(0)
    kx, kw, kb = jax.random.split(key, 3)

    # Deterministic parameter init (mimics nn.Linear's U(-1/sqrt(F), 1/sqrt(F))).
    bound = 1.0 / jnp.sqrt(jnp.float32(in_features))
    weight = jax.random.uniform(
        kw, (num_classes, in_features), jnp.float32, -bound, bound
    )  # PyTorch stores (out, in)
    bias = jax.random.uniform(kb, (num_classes,), jnp.float32, -bound, bound)
    x = jax.random.normal(kx, (batch, in_features), jnp.float32)

    # One-time parameter prep (hoisted out of the per-call path).
    w_t, b_row = prepare_linear_params(weight, bias)

    # --- f32 path (exact parity with the PyTorch module) --------------------
    y = jax.block_until_ready(linear_regression_forward(x, w_t, b_row))
    y_ref = x.reshape(batch, -1) @ weight.T + bias
    assert y.shape == (batch, num_classes)
    assert jnp.allclose(y, y_ref, atol=1e-5, rtol=1e-5)

    # --- multi-tile path with a partial last block (no wrapper-side pad) ----
    xb = jax.random.normal(jax.random.PRNGKey(1), (200, in_features), jnp.float32)
    yb = jax.block_until_ready(
        linear_regression_forward(xb, w_t, b_row, max_tile_rows=64))
    yb_ref = xb @ weight.T + bias
    assert yb.shape == (200, num_classes)
    assert jnp.allclose(yb, yb_ref, atol=1e-5, rtol=1e-5)

    # --- bf16 streaming + bf16 output (valid on v5e/v6e/v7x), loose check ---
    w_t_h, b_row_h = prepare_linear_params(weight, bias, compute_dtype=jnp.bfloat16)
    yh = jax.block_until_ready(
        linear_regression_forward(xb, w_t_h, b_row_h, output_dtype=jnp.bfloat16))
    assert yh.dtype == jnp.bfloat16
    assert jnp.allclose(yh.astype(jnp.float32), yb_ref, atol=5e-2, rtol=5e-2)

    print("KERNEL_OK")
</pallas_src>

<mosaic_0001>
module attributes {stable_mosaic.version = 11 : i64} {
  func.func @_linear_kernel(%arg0: i32, %arg1: memref<2x32xf32, #tpu.memory_space<vmem>>, %arg2: memref<32x8xf32, #tpu.memory_space<vmem>>, %arg3: memref<1x8xf32, #tpu.memory_space<vmem>>, %arg4: memref<2x8xf32, #tpu.memory_space<vmem>>) attributes {dimension_semantics = [#tpu.dimension_semantics<parallel>], iteration_bounds = array<i64: 1>, scalar_prefetch = 0 : i64, scratch_operands = 0 : i64, tpu.core_type = #tpu.core_type<tc>, window_params = [{transform_indices = @transform_0, window_bounds = array<i64: 2, 32>}, {pipeline_mode = #tpu.pipeline_mode<synchronous>, transform_indices = @transform_1, window_bounds = array<i64: 32, 8>}, {pipeline_mode = #tpu.pipeline_mode<synchronous>, transform_indices = @transform_2, window_bounds = array<i64: 1, 8>}, {transform_indices = @transform_3, window_bounds = array<i64: 2, 8>}]} {
    %c0 = arith.constant 0 : index
    %c0_0 = arith.constant 0 : index
    %0 = vector.load %arg1[%c0, %c0_0] : memref<2x32xf32, #tpu.memory_space<vmem>>, vector<2x32xf32>
    %c0_1 = arith.constant 0 : index
    %c0_2 = arith.constant 0 : index
    %1 = vector.load %arg2[%c0_1, %c0_2] : memref<32x8xf32, #tpu.memory_space<vmem>>, vector<32x8xf32>
    %cst = arith.constant dense<0.000000e+00> : vector<2x8xf32>
    %2 = tpu.matmul %0, %1, %cst {dimension_numbers = #tpu.dot_dimension_numbers<[1], [0], [0], [1], [0, 0, 1, 1], [], []>} : vector<2x32xf32>, vector<32x8xf32>, vector<2x8xf32> -> vector<2x8xf32>
    %c0_3 = arith.constant 0 : index
    %c0_4 = arith.constant 0 : index
    %3 = vector.load %arg3[%c0_3, %c0_4] : memref<1x8xf32, #tpu.memory_space<vmem>>, vector<1x8xf32>
    %4 = vector.broadcast %3 : vector<1x8xf32> to vector<2x8xf32>
    %5 = arith.addf %2, %4 : vector<2x8xf32>
    %c0_5 = arith.constant 0 : index
    %c0_6 = arith.constant 0 : index
    %6 = vector.load %arg4[%c0_5, %c0_6] : memref<2x8xf32, #tpu.memory_space<vmem>>, vector<2x8xf32>
    tpu.vector_store %arg4[%c0_5, %c0_6], %5 {strides = array<i32>} : memref<2x8xf32, #tpu.memory_space<vmem>>, vector<2x8xf32>,
    return
  }
  func.func @transform_0(%arg0: i32) -> (i32, i32) {
    %c0_i32 = arith.constant 0 : i32
    %c0_i32_0 = arith.constant 0 : i32
    return %arg0, %c0_i32 : i32, i32
  }
  func.func @transform_1(%arg0: i32) -> (i32, i32) {
    %c0_i32 = arith.constant 0 : i32
    %c0_i32_0 = arith.constant 0 : i32
    %c0_i32_1 = arith.constant 0 : i32
    return %c0_i32, %c0_i32_0 : i32, i32
  }
  func.func @transform_2(%arg0: i32) -> (i32, i32) {
    %c0_i32 = arith.constant 0 : i32
    %c0_i32_0 = arith.constant 0 : i32
    %c0_i32_1 = arith.constant 0 : i32
    return %c0_i32, %c0_i32_0 : i32, i32
  }
  func.func @transform_3(%arg0: i32) -> (i32, i32) {
    %c0_i32 = arith.constant 0 : i32
    %c0_i32_0 = arith.constant 0 : i32
    return %arg0, %c0_i32 : i32, i32
  }
}

</mosaic_0001>

<llo_original>
// kernel: tpu_custom_call.1
$region0: #{tpu_custom_call.1}
  #allocation0 [shape = 'u32[]', space=smem, size = 0x4, offset = 0x4, fixed_abs, tag = 'smem constant byte address 0x4 - core index']
  #allocation1 [shape = 'u32[72,128]{1,0:T(1,128)}', space=vmem, size = 0x9000, scoped, tag = 'internal scratch']
  %s0 = inlined_call_operand.vmem [shape: f32[2,32], index: 0, kind: input, shape index: {}]
  %s1 = inlined_call_operand.vmem [shape: f32[32,8], index: 1, kind: input, shape index: {}]
  %s2 = inlined_call_operand.vmem [shape: f32[1,8], index: 2, kind: input, shape index: {}]
  %s3 = inlined_call_operand.hbm [shape: f32[2,8], index: 3, kind: output, shape index: {}]
  %s4 = sld [smem:[#allocation0]]
  $region22: #{tpu_custom_call.1} parent=0
    _
  %s6 = ssub.s32 1, %s4
  %s7 = scalar_select 0, %s6, %s4
  $region1: #{tpu_custom_call.1} parent=0
    #allocation2 [shape = 'u8[1024]{0}', space=vmem, size = 0x400, scoped, tag = 'output window, operand 0, single buffered']
    #allocation3 [shape = 's32[1]{0}', space=sflag, size = 0x4, scoped, tag = 'scoped memory for tpu_custom_call.1']
    %8 = vsyncpa [#allocation3], 0
    // Predicated region
    $region2: #{tpu_custom_call.1} parent=1 // pred_check
      _
    $region3: #{tpu_custom_call.1} parent=1 // pred_check_branch
      %10 = sbr.rel (0) target = $region5
    $region4: #{tpu_custom_call.1} parent=1 // pred_region
      _
    $region5: #{tpu_custom_call.1} parent=1 // pred_fallthru
      _
    // Predicated region
    $region6: #{tpu_custom_call.1} parent=1 // pred_check
      _
    $region7: #{tpu_custom_call.1} parent=1 // pred_check_branch
      %12 = sbr.rel (0) target = $region9
    $region8: #{tpu_custom_call.1} parent=1 // pred_region
      _
    $region9: #{tpu_custom_call.1} parent=1 // pred_fallthru
      _
    // Predicated region
    $region10: #{tpu_custom_call.1} parent=1 // pred_check
      _
    $region11: #{tpu_custom_call.1} parent=1 // pred_check_branch
      %14 = sbr.rel (0) target = $region13
    $region12: #{tpu_custom_call.1} parent=1 // pred_region
      _
    $region13: #{tpu_custom_call.1} parent=1 // pred_fallthru
      _
    %v15 = vld [vmem:[%s0] sm:$0x3]
    %v16 = vld [vmem:[%s1] sm:$0xff]
    %v17 = vld [vmem:[%s1 + $0x8] sm:$0xff]
    %v18 = vld [vmem:[%s1 + $0x10] sm:$0xff]
    %v19 = vld [vmem:[%s1 + $0x18] sm:$0xff]
    %v20 = vld [vmem:[%s2] sm:$0x1]
    %v22 = vperm.slane %v20, 0
    %vm24 = vcmask 261120
    %v26 = vsel %vm24, %v15, 0
    %28 = vmatpush.msra.mxu0 0.0
    %29 = vmatpush.msra.mxu0 0.0
    %30 = vmatpush.msra.mxu0 0.0
    %31 = vmatpush.msra.mxu0 0.0
    %32 = vmatpush.msra.mxu0 0.0
    %33 = vmatpush.msra.mxu0 0.0
    %34 = vmatpush.msra.mxu0 0.0
    %35 = vmatpush.msra.mxu0 0.0
    %36 = vmatpush.msra.mxu0 0.0
    %37 = vmatpush.msra.mxu0 0.0
    %38 = vmatpush.msra.mxu0 0.0
    %39 = vmatpush.msra.mxu0 0.0
    %40 = vmatpush.msra.mxu0 %v19
    %41 = vmatpush.msra.mxu0 %v18
    %42 = vmatpush.msra.mxu0 %v17
    %43 = vmatpush.msra.mxu0 %v16
    %44 = vmatmul.f32.gmra.mxu0 %v26
    %v45 = vpop.f32.mrf.mxu0
    %v46 = vadd.f32 %v22, %v45
    %47 = vdwg.mxu0
    %vm48 = vcmask 58368
    %49 = vst.msk [vmem:[#allocation2] sm:$0x3] %vm48, %v46
    // Predicated region
    $region14: #{tpu_custom_call.1} parent=1 // pred_check
      _
    $region15: #{tpu_custom_call.1} parent=1 // pred_check_branch
      %51 = sbr.rel (0) target = $region17
    $region16: #{tpu_custom_call.1} parent=1 // pred_region
      %53 = vsyncadd [#allocation3], 0
      %s55 = sshll.u32 [#allocation2], 4
      %s56 = int_to_ptr.vmem [resolvable:$true] %s55
      %s57 = sshll.u32 %s3, 4
      %s58 = int_to_ptr.hbm [resolvable:$true] %s57
      %60 = dma.vmem_to_hbm [thread:$0]  %s56, 32, %s58, [#allocation3]
    $region17: #{tpu_custom_call.1} parent=1 // pred_fallthru
      _
    // Predicated region
    $region18: #{tpu_custom_call.1} parent=1 // pred_check
      _
    $region19: #{tpu_custom_call.1} parent=1 // pred_check_branch
      %62 = sbr.rel (0) target = $region21
    $region20: #{tpu_custom_call.1} parent=1 // pred_region
      %64 = dma.done [#allocation3], 32
    $region21: #{tpu_custom_call.1} parent=1 // pred_fallthru
      _
    %65 = vsyncpa [#allocation3], 1

</llo_original>
